<compile_context>
chip_gen: v7x
topology: tpu7x:2x2x1
jax: 0.10.0
libtpu: 0.0.40
codegen_flags: <defaults>
</compile_context>

<pallas_src>
import functools
from typing import List, Optional

import numpy as np

import jax
import jax.numpy as jnp
from jax import lax
from jax.experimental import pallas as pl
from jax.experimental.pallas import tpu as pltpu


def _ctc_greedy_kernel(x_ref, len_ref, out_ref, carry_ref, *, blank_index: int):
    """One (b_tile, t_tile) block: alphabet argmax + greedy keep mask, fused output."""
    ti = pl.program_id(1)                            # T-tile index (inner, sequential)
    x = x_ref[...]                                   # (Tt, Bt, A)
    Tt, Bt, A = x.shape

    # ---- first-occurrence argmax over the alphabet (lane) axis ----
    max_val = jnp.max(x, axis=-1, keepdims=True)     # (Tt, Bt, 1)
    # (1, 1, A) iota broadcast inside the where -> no x-sized iota temporary.
    sym_idx = lax.broadcasted_iota(jnp.int32, (1, 1, A), 2)
    cand = jnp.where(x == max_val, sym_idx, jnp.int32(A))
    ml = jnp.min(cand, axis=-1)                      # (Tt, Bt) int32

    # ---- greedy keep mask: length mask, blank removal, repeat collapse ----
    local_t = lax.broadcasted_iota(jnp.int32, (Tt, Bt), 0)
    global_t = local_t + ti * Tt

    prev = jnp.roll(ml, 1, axis=0)                   # within-tile previous symbol (XLU)
    # Row 0 of the tile takes the previous T-tile's last argmax from the carry.
    # (For the first T-tile the carry is garbage but the global_t == 0 term in
    #  `keep` makes row 0 independent of `prev`.)
    prev = jnp.where(local_t == 0, carry_ref[...], prev)

    lengths = len_ref[...]                           # (1, Bt) int32, broadcasts over T
    blank = jnp.int32(blank_index)
    valid = global_t < lengths
    keep = valid & (ml != blank) & ((global_t == 0) | (prev == blank) | (ml != prev))

    # Fused output: kept symbol, else -1 sentinel (host filters >= 0).
    out_ref[...] = jnp.where(keep, ml, jnp.int32(-1))

    # Carry this tile's last argmax into the next T-tile (T grid is sequential).
    carry_ref[...] = ml[Tt - 1:Tt, :]


def _choose_b_tile(B: int) -> int:
    """The output's lane axis is B, so sub-B tiles must be a multiple of 128 to
    keep output stores unmasked.  Only split large batches (enables the
    "parallel" batch axis to be sharded across v7x megacores)."""
    if B > 128 and B % 128 == 0:
        return 128
    return B


def _choose_t_tile(T: int, b_tile: int, A: int, itemsize: int) -> int:
    """Pick a T tile giving ~2 MiB x-blocks (x2 double-buffering + int
    temporaries stays well inside scoped-VMEM defaults on v5e/v6e/v7x),
    rounded to a multiple of 8 for the (8,128) constraint on the output block."""
    target_bytes = 2 * 1024 * 1024
    rows = target_bytes // max(1, b_tile * A * itemsize)
    if rows >= T:
        return T
    return min(T, max(8, (rows // 8) * 8))


@functools.partial(jax.jit, static_argnames=("blank_index", "t_tile", "b_tile"))
def _run_kernel(x: jax.Array, lengths_2d: jax.Array, blank_index: int,
                t_tile: int, b_tile: int):
    T, B, A = x.shape
    kernel = functools.partial(_ctc_greedy_kernel, blank_index=blank_index)
    return pl.pallas_call(
        kernel,
        out_shape=jax.ShapeDtypeStruct((T, B), jnp.int32),
        grid_spec=pltpu.PrefetchScalarGridSpec(
            num_scalar_prefetch=0,
            grid=(pl.cdiv(B, b_tile), pl.cdiv(T, t_tile)),
            in_specs=[
                pl.BlockSpec((t_tile, b_tile, A), lambda b, t: (t, b, 0)),
                pl.BlockSpec((1, b_tile), lambda b, t: (0, b)),
            ],
            out_specs=pl.BlockSpec((t_tile, b_tile), lambda b, t: (t, b)),
            scratch_shapes=[pltpu.VMEM((1, b_tile), jnp.int32)],  # prev-symbol carry
        ),
        compiler_params=pltpu.CompilerParams(
            # Batch tiles are independent (megacore-shardable); carry
            # dependence across T tiles -> sequential ("arbitrary").
            dimension_semantics=("parallel", "arbitrary"),
            vmem_limit_bytes=32 * 1024 * 1024,
        ),
    )(x, lengths_2d)


class CTCGreedyDecoder:
    """JAX/Pallas port of myrtlespeech CTCGreedyDecoder."""

    _SUPPORTED_LEN_DTYPES = (np.uint8, np.int8, np.int16, np.int32, np.int64)

    def __init__(self, blank_index: int):
        self.blank_index = blank_index

    def __call__(self, x: jax.Array, lengths: jax.Array,
                 t_tile: Optional[int] = None,
                 b_tile: Optional[int] = None) -> List[List[int]]:
        if np.dtype(lengths.dtype) not in [np.dtype(d) for d in self._SUPPORTED_LEN_DTYPES]:
            raise ValueError(
                f"lengths.dtype={lengths.dtype} must be in "
                f"{[np.dtype(d).name for d in self._SUPPORTED_LEN_DTYPES]}")

        seq_len, x_batch, alphabet = x.shape
        l_batch = lengths.shape[0]
        if x_batch != l_batch:
            raise ValueError(
                f"batch size of x ({x_batch}) and lengths ({l_batch}) must be equal")

        if b_tile is None:
            b_tile = _choose_b_tile(x_batch)
        if t_tile is None:
            t_tile = _choose_t_tile(seq_len, int(b_tile), alphabet,
                                    np.dtype(x.dtype).itemsize)

        lengths_2d = jnp.asarray(lengths, dtype=jnp.int32).reshape(1, x_batch)
        out = _run_kernel(x, lengths_2d, self.blank_index,
                          int(t_tile), int(b_tile))                 # async launch

        # Deferred host-side validation: overlaps device execution instead of
        # forcing a blocking sync before the launch.  (Invalid lengths are
        # harmless to the kernel; it just masks with t < length.)
        lengths_np = np.asarray(jax.device_get(lengths)).astype(np.int64)
        if lengths_np.size and (lengths_np > seq_len).any():
            raise ValueError("length values must be less than or equal to x seq_len")

        out_np = np.asarray(jax.device_get(jax.block_until_ready(out)))

        # Vectorized ragged packing: kept symbols are >= 0, dropped are -1.
        result: List[List[int]] = []
        for b in range(x_batch):
            col = out_np[:, b]
            result.append(col[col >= 0].astype(np.int64).tolist())
        return result


def _reference_decode(x: np.ndarray, lengths: np.ndarray, blank_index: int) -> List[List[int]]:
    most_likely = x.argmax(axis=2)
    out = []
    for b in range(x.shape[1]):
        sentence = []
        prev = None
        for i in range(int(lengths[b])):
            symb = int(most_likely[i, b])
            if symb != blank_index:
                if prev is None or prev == blank_index or symb != prev:
                    sentence.append(symb)
            prev = symb
        out.append(sentence)
    return out


if __name__ == "__main__":
    key = jax.random.PRNGKey(0)
    blank_index = 0
    decoder = CTCGreedyDecoder(blank_index=blank_index)

    # ---- small shape: exercises the cross-T-tile carry (4 T-tiles) ----
    # Small alphabet so blanks and repeated argmaxes actually occur.
    seq_len, batch, alphabet = 32, 4, 8
    k1, k2, k3 = jax.random.split(key, 3)
    x = jax.random.normal(k1, (seq_len, batch, alphabet), dtype=jnp.float32)
    lengths = jnp.array([32, 17, 8, 0], dtype=jnp.int32)

    ref = _reference_decode(np.asarray(jax.device_get(x)),
                            np.asarray(jax.device_get(lengths)), blank_index)
    decoded_tiled = decoder(x, lengths, t_tile=8)     # 4 T-tiles -> carry path
    decoded_auto = decoder(x, lengths)                # single block at this shape
    assert decoded_tiled == ref, f"tiled mismatch:\n kernel={decoded_tiled}\n ref={ref}"
    assert decoded_auto == ref, f"auto mismatch:\n kernel={decoded_auto}\n ref={ref}"

    # ---- larger batch: exercises the "parallel" batch-tile axis (2 b-tiles) ----
    T2, B2, A2 = 24, 256, 8
    x2 = jax.random.normal(k2, (T2, B2, A2), dtype=jnp.float32)
    lengths2 = jax.random.randint(k3, (B2,), 0, T2 + 1, dtype=jnp.int32)
    ref2 = _reference_decode(np.asarray(jax.device_get(x2)),
                             np.asarray(jax.device_get(lengths2)), blank_index)
    decoded2 = decoder(x2, lengths2, t_tile=8)        # b_tile auto -> 128
    assert decoded2 == ref2, "batch-tiled mismatch"

    print("KERNEL_OK")
</pallas_src>

<mosaic_0001>
module attributes {stable_mosaic.version = 11 : i64} {
  func.func @_ctc_greedy_kernel(%arg0: i32, %arg1: i32, %arg2: memref<8x4x8xf32, #tpu.memory_space<vmem>>, %arg3: memref<1x4xi32, #tpu.memory_space<vmem>>, %arg4: memref<8x4xi32, #tpu.memory_space<vmem>>, %arg5: memref<1x4xi32, #tpu.memory_space<vmem>>) attributes {dimension_semantics = [#tpu.dimension_semantics<parallel>, #tpu.dimension_semantics<arbitrary>], iteration_bounds = array<i64: 1, 4>, scalar_prefetch = 0 : i64, scratch_operands = 1 : i64, tpu.core_type = #tpu.core_type<tc>, window_params = [{transform_indices = @transform_0, window_bounds = array<i64: 8, 4, 8>}, {transform_indices = @transform_1, window_bounds = array<i64: 1, 4>}, {transform_indices = @transform_2, window_bounds = array<i64: 8, 4>}]} {
    %c0 = arith.constant 0 : index
    %c0_0 = arith.constant 0 : index
    %c0_1 = arith.constant 0 : index
    %0 = vector.load %arg2[%c0, %c0_0, %c0_1] : memref<8x4x8xf32, #tpu.memory_space<vmem>>, vector<8x4x8xf32>
    %cst = arith.constant dense<0xFF800000> : vector<8x4xf32>
    %1 = vector.multi_reduction <maximumf>, %0, %cst [2] : vector<8x4x8xf32> to vector<8x4xf32>
    %2 = vector.shape_cast %1 : vector<8x4xf32> to vector<8x4x1xf32>
    %3 = tpu.iota {dimensions = array<i32: 2>} : vector<1x1x8xi32>
    %4 = vector.broadcast %2 : vector<8x4x1xf32> to vector<8x4x8xf32>
    %5 = arith.cmpf oeq, %0, %4 : vector<8x4x8xf32>
    %c8_i32 = arith.constant 8 : i32
    %6 = vector.shape_cast %3 : vector<1x1x8xi32> to vector<1x1x8xi32>
    %7 = vector.broadcast %6 : vector<1x1x8xi32> to vector<8x4x8xi32>
    %8 = vector.broadcast %c8_i32 : i32 to vector<8x4x8xi32>
    %9 = arith.select %5, %7, %8 : vector<8x4x8xi1>, vector<8x4x8xi32>
    %cst_2 = arith.constant dense<2147483647> : vector<8x4xi32>
    %10 = vector.multi_reduction <minsi>, %9, %cst_2 [2] : vector<8x4x8xi32> to vector<8x4xi32>
    %11 = tpu.iota {dimensions = array<i32: 0>} : vector<8x4xi32>
    %c8_i32_3 = arith.constant 8 : i32
    %12 = arith.muli %arg1, %c8_i32_3 : i32
    %13 = vector.broadcast %12 : i32 to vector<8x4xi32>
    %14 = arith.addi %11, %13 : vector<8x4xi32>
    %15 = vector.extract_strided_slice %10 {offsets = [7, 0], sizes = [1, 4], strides = [1, 1]} : vector<8x4xi32> to vector<1x4xi32>
    %16 = vector.extract_strided_slice %10 {offsets = [0, 0], sizes = [7, 4], strides = [1, 1]} : vector<8x4xi32> to vector<7x4xi32>
    %17 = tpu.concatenate %15, %16 in 0 : vector<1x4xi32>, vector<7x4xi32> -> vector<8x4xi32>
    %c0_i32 = arith.constant 0 : i32
    %18 = vector.broadcast %c0_i32 : i32 to vector<8x4xi32>
    %19 = arith.cmpi eq, %11, %18 : vector<8x4xi32>
    %c0_4 = arith.constant 0 : index
    %c0_5 = arith.constant 0 : index
    %20 = vector.load %arg5[%c0_4, %c0_5] : memref<1x4xi32, #tpu.memory_space<vmem>>, vector<1x4xi32>
    %21 = vector.shape_cast %20 : vector<1x4xi32> to vector<1x4xi32>
    %22 = vector.broadcast %21 : vector<1x4xi32> to vector<8x4xi32>
    %23 = arith.select %19, %22, %17 : vector<8x4xi1>, vector<8x4xi32>
    %c0_6 = arith.constant 0 : index
    %c0_7 = arith.constant 0 : index
    %24 = vector.load %arg3[%c0_6, %c0_7] : memref<1x4xi32, #tpu.memory_space<vmem>>, vector<1x4xi32>
    %25 = vector.broadcast %24 : vector<1x4xi32> to vector<8x4xi32>
    %26 = arith.cmpi slt, %14, %25 : vector<8x4xi32>
    %c0_i32_8 = arith.constant 0 : i32
    %27 = vector.broadcast %c0_i32_8 : i32 to vector<8x4xi32>
    %28 = arith.cmpi ne, %10, %27 : vector<8x4xi32>
    %29 = arith.andi %26, %28 : vector<8x4xi1>
    %c0_i32_9 = arith.constant 0 : i32
    %30 = vector.broadcast %c0_i32_9 : i32 to vector<8x4xi32>
    %31 = arith.cmpi eq, %14, %30 : vector<8x4xi32>
    %c0_i32_10 = arith.constant 0 : i32
    %32 = vector.broadcast %c0_i32_10 : i32 to vector<8x4xi32>
    %33 = arith.cmpi eq, %23, %32 : vector<8x4xi32>
    %34 = arith.ori %31, %33 : vector<8x4xi1>
    %35 = arith.cmpi ne, %10, %23 : vector<8x4xi32>
    %36 = arith.ori %34, %35 : vector<8x4xi1>
    %37 = arith.andi %29, %36 : vector<8x4xi1>
    %c-1_i32 = arith.constant -1 : i32
    %38 = vector.broadcast %c-1_i32 : i32 to vector<8x4xi32>
    %39 = arith.select %37, %10, %38 : vector<8x4xi1>, vector<8x4xi32>
    %c0_11 = arith.constant 0 : index
    %c0_12 = arith.constant 0 : index
    %40 = vector.load %arg4[%c0_11, %c0_12] : memref<8x4xi32, #tpu.memory_space<vmem>>, vector<8x4xi32>
    tpu.vector_store %arg4[%c0_11, %c0_12], %39 {strides = array<i32>} : memref<8x4xi32, #tpu.memory_space<vmem>>, vector<8x4xi32>,
    %41 = vector.extract_strided_slice %10 {offsets = [7, 0], sizes = [1, 4], strides = [1, 1]} : vector<8x4xi32> to vector<1x4xi32>
    %c0_13 = arith.constant 0 : index
    %c0_14 = arith.constant 0 : index
    %42 = vector.load %arg5[%c0_13, %c0_14] : memref<1x4xi32, #tpu.memory_space<vmem>>, vector<1x4xi32>
    tpu.vector_store %arg5[%c0_13, %c0_14], %41 {strides = array<i32>} : memref<1x4xi32, #tpu.memory_space<vmem>>, vector<1x4xi32>,
    return
  }
  func.func @transform_0(%arg0: i32, %arg1: i32) -> (i32, i32, i32) {
    %c0_i32 = arith.constant 0 : i32
    %c0_i32_0 = arith.constant 0 : i32
    return %arg1, %arg0, %c0_i32 : i32, i32, i32
  }
  func.func @transform_1(%arg0: i32, %arg1: i32) -> (i32, i32) {
    %c0_i32 = arith.constant 0 : i32
    %c0_i32_0 = arith.constant 0 : i32
    return %c0_i32, %arg0 : i32, i32
  }
  func.func @transform_2(%arg0: i32, %arg1: i32) -> (i32, i32) {
    %c0_i32 = arith.constant 0 : i32
    return %arg1, %arg0 : i32, i32
  }
}

</mosaic_0001>

<llo_original>
// kernel: _run_kernel.1
$region0: #{_run_kernel.1}
  #allocation0 [shape = 'u32[]', space=smem, size = 0x4, offset = 0x4, fixed_abs, tag = 'smem constant byte address 0x4 - core index']
  #allocation1 [shape = 'u32[144,128]{1,0:T(1,128)}', space=vmem, size = 0x12000, scoped, tag = 'internal scratch']
  #allocation2 [shape = 's32[1,4]{1,0:T(1,128)}', space=vmem, size = 0x200, scoped, tag = 'scratch operand']
  %s0 = inlined_call_operand.vmem [shape: f32[32,4,8], index: 0, kind: input, shape index: {}]
  %s1 = inlined_call_operand.vmem [shape: s32[1,4], index: 1, kind: input, shape index: {}]
  %s2 = inlined_call_operand.vmem [shape: s32[32,4], index: 2, kind: output, shape index: {}]
  %s3 = sld [smem:[#allocation0]]
  $region41: #{_run_kernel.1} parent=0
    _
  %s5 = ssub.s32 1, %s3
  %s6 = scalar_select 0, %s5, %s3
  loop: start=0, step=1, limit=6
  $region2: #{_run_kernel.1} parent=0 // loop_pre_header
    _
  $region3: #{_run_kernel.1} parent=0 // loop_header
    %s8 = sphi 0, %s12
    %p9 = scmp.ge.s32.totalorder %s8, 6
    %s15 = sphi 0, %s27
    %s16 = sphi 0, %s23
    %s17 = sphi 0, %s15
    %s18 = sphi 0, %s16
    %s19 = sphi 0, %s17
    %s20 = sphi 0, %s18
    %s32 = sphi 0, %s34
    %s35 = sphi 0, %s32
    %s36 = sphi 0, %s35
    %s52 = sphi 0, %s36
    %s58 = sphi 0, %s60
    %s61 = sphi 0, %s58
    %s62 = sphi 0, %s61
    %s78 = sphi 0, %s62
    %s86 = sphi 0, %s88
    %s89 = sphi 0, %s86
    %s90 = sphi 0, %s89
    %s106 = sphi 0, %s90
  $region4: #{_run_kernel.1} parent=0 // loop_header_branch
    %11 = sbr.rel (%p9) target = $region8
  $region5: #{_run_kernel.1} parent=0 // loop_body
    %s13 = ssub.s32 %s8, 1
    %s14 = ssub.s32 %s8, 2
    %s21 = sadd.s32 1, %s16
    %p22 = scmp.ge.s32.totalorder %s21, 4
    %s23 = scalar_select %p22, 0, %s21
    %s24 = sadd.s32 1, %s15
    %s25 = scalar_select %p22, %s24, %s15
    %p26 = scmp.ge.s32.totalorder %s25, 1
    %s27 = scalar_select %p26, 0, %s25
    %s28 = ssub.s32 %s16, %s23
    %s29 = ssub.s32 %s15, %s27
    %s30 = sor.u32 %s28, %s29
    %p31 = scmp.eq.s32.totalorder %s30, 0
    %s33 = sadd.s32 %s32, 1
    %s34 = scalar_select %p31, %s32, %s33
    %p37 = pneg %p31
    %p38 = scmp.eq.s32.totalorder %s8, 3
    %p39 = por %p37, %p38
    %p40 = scmp.ne.s32.totalorder %s32, %s35
    %p41 = scmp.eq.s32.totalorder %s8, 0
    %p42 = por %p40, %p41
    %p43 = scmp.ne.s32.totalorder %s32, %s35
    %p44 = scmp.eq.s32.totalorder %s13, 3
    %p45 = por %p43, %p44
    %p46 = scmp.ne.s32.totalorder %s35, %s36
    %p47 = scmp.eq.s32.totalorder %s13, 0
    %p48 = por %p46, %p47
    %p49 = scmp.ne.s32.totalorder %s35, %s36
    %p50 = scmp.eq.s32.totalorder %s14, 3
    %p51 = por %p49, %p50
    %p53 = scmp.ne.s32.totalorder %s36, %s52
    %p54 = scmp.eq.s32.totalorder %s14, 0
    %p55 = por %p53, %p54
    %s56 = ssub.s32 %s15, %s27
    %p57 = scmp.eq.s32.totalorder %s56, 0
    %s59 = sadd.s32 %s58, 1
    %s60 = scalar_select %p57, %s58, %s59
    %p63 = pneg %p57
    %p64 = scmp.eq.s32.totalorder %s8, 3
    %p65 = por %p63, %p64
    %p66 = scmp.ne.s32.totalorder %s58, %s61
    %p67 = scmp.eq.s32.totalorder %s8, 0
    %p68 = por %p66, %p67
    %p69 = scmp.ne.s32.totalorder %s58, %s61
    %p70 = scmp.eq.s32.totalorder %s13, 3
    %p71 = por %p69, %p70
    %p72 = scmp.ne.s32.totalorder %s61, %s62
    %p73 = scmp.eq.s32.totalorder %s13, 0
    %p74 = por %p72, %p73
    %p75 = scmp.ne.s32.totalorder %s61, %s62
    %p76 = scmp.eq.s32.totalorder %s14, 3
    %p77 = por %p75, %p76
    %p79 = scmp.ne.s32.totalorder %s62, %s78
    %p80 = scmp.eq.s32.totalorder %s14, 0
    %p81 = por %p79, %p80
    %s82 = ssub.s32 %s16, %s23
    %s83 = ssub.s32 %s15, %s27
    %s84 = sor.u32 %s82, %s83
    %p85 = scmp.eq.s32.totalorder %s84, 0
    %s87 = sadd.s32 %s86, 1
    %s88 = scalar_select %p85, %s86, %s87
    %p91 = pneg %p85
    %p92 = scmp.eq.s32.totalorder %s8, 3
    %p93 = por %p91, %p92
    %p94 = scmp.ne.s32.totalorder %s86, %s89
    %p95 = scmp.eq.s32.totalorder %s8, 0
    %p96 = por %p94, %p95
    %p97 = scmp.ne.s32.totalorder %s86, %s89
    %p98 = scmp.eq.s32.totalorder %s13, 3
    %p99 = por %p97, %p98
    %p100 = scmp.ne.s32.totalorder %s89, %s90
    %p101 = scmp.eq.s32.totalorder %s13, 0
    %p102 = por %p100, %p101
    %p103 = scmp.ne.s32.totalorder %s89, %s90
    %p104 = scmp.eq.s32.totalorder %s14, 3
    %p105 = por %p103, %p104
    %p107 = scmp.ne.s32.totalorder %s90, %s106
    %p108 = scmp.eq.s32.totalorder %s14, 0
    %p109 = por %p107, %p108
    %p110 = scmp.le.s32.totalorder 1, %s8
    %p111 = scmp.lt.s32.totalorder %s8, 5
    %p112 = pnand %p110, %p111
    %p113 = pneg %p112
    // Predicated region
    $region9: #{_run_kernel.1} parent=5 // pred_check
      _
    $region10: #{_run_kernel.1} parent=5 // pred_check_branch
      %115 = sbr.rel (%p112) target = $region12
    $region11: #{_run_kernel.1} parent=5 // pred_region
      %s116 = ssub.s32 %s8, 1
      // Predicated region
      $region13: #{_run_kernel.1} parent=11 // pred_check
        %p117 = pneg %p74
      $region14: #{_run_kernel.1} parent=11 // pred_check_branch
        %119 = sbr.rel (%p117) target = $region16
      $region15: #{_run_kernel.1} parent=11 // pred_region
        %p120 = scmp.lt.s32.totalorder %s17, 0
        %s121 = scalar_select %p120, %s17, 0
        %s122 = scalar_lea.vmem %s1, %s121
      $region16: #{_run_kernel.1} parent=11 // pred_fallthru
        _
    $region12: #{_run_kernel.1} parent=5 // pred_fallthru
      _
    %p123 = scmp.lt.s32.totalorder %s8, 4
    // Predicated region
    $region17: #{_run_kernel.1} parent=5 // pred_check
      %p124 = pneg %p123
    $region18: #{_run_kernel.1} parent=5 // pred_check_branch
      %126 = sbr.rel (%p124) target = $region20
    $region19: #{_run_kernel.1} parent=5 // pred_region
      // Predicated region
      $region21: #{_run_kernel.1} parent=19 // pred_check
        %p127 = pneg %p42
      $region22: #{_run_kernel.1} parent=19 // pred_check_branch
        %129 = sbr.rel (%p127) target = $region24
      $region23: #{_run_kernel.1} parent=19 // pred_region
        %s130 = smul.u32 8, %s16
        %p131 = scmp.lt.s32.totalorder %s130, 31
        %s132 = scalar_select %p131, %s130, 31
        %p133 = scmp.lt.s32.totalorder %s15, 0
        %s134 = scalar_select %p133, %s15, 0
        %s135 = sadd.s32 %s134, %s132
        %s136 = smul.addr %s135, 4
        %s137 = scalar_lea.vmem %s0, %s136
        %s138 = smul.u32 8, %s16
      $region24: #{_run_kernel.1} parent=19 // pred_fallthru
        _
    $region20: #{_run_kernel.1} parent=5 // pred_fallthru
      _
    %p139 = scmp.le.s32.totalorder 1, %s8
    %p140 = scmp.lt.s32.totalorder %s8, 5
    %p141 = pnand %p139, %p140
    %p142 = pneg %p141
    // Predicated region
    $region25: #{_run_kernel.1} parent=5 // pred_check
      _
    $region26: #{_run_kernel.1} parent=5 // pred_check_branch
      %144 = sbr.rel (%p141) target = $region28
    $region27: #{_run_kernel.1} parent=5 // pred_region
      %s145 = ssub.s32 %s8, 1
      %s146 = smul.u32 8, %s18
      %p147 = scmp.lt.s32.totalorder %s146, 31
      %s148 = scalar_select %p147, %s146, 31
      %p149 = scmp.lt.s32.totalorder %s17, 0
      %s150 = scalar_select %p149, %s17, 0
      %s151 = sadd.s32 %s150, %s148
      %s152 = smul.addr %s151, 4
      %s153 = scalar_lea.vmem %s0, %s152
      %p154 = pneg %p48
      %p155 = pneg %p45
      %p156 = scmp.lt.s32.totalorder %s17, 0
      %s157 = scalar_select %p156, %s17, 0
      %s158 = scalar_lea.vmem %s1, %s157
      %p159 = pneg %p74
      %p160 = pneg %p71
      %p161 = pneg %p102
      %p162 = pneg %p99
      %p163 = scmp.lt.s32.totalorder %s18, 3
      %s164 = scalar_select %p163, %s18, 3
      %p165 = scmp.lt.s32.totalorder %s17, 0
      %s166 = scalar_select %p165, %s17, 0
      %s167 = sadd.s32 %s166, %s164
      %s168 = smul.addr %s167, 8
      %s169 = scalar_lea.vmem %s2, %s168
      %s170 = smul.u32 8, %s18
      %p171 = scmp.lt.s32.totalorder %s170, 31
      %s172 = scalar_select %p171, %s170, 31
      %p173 = scmp.lt.s32.totalorder %s17, 0
      %s174 = scalar_select %p173, %s17, 0
      %s175 = sadd.s32 %s174, %s172
      %s176 = smul.addr %s175, 4
      %s177 = scalar_lea.vmem %s0, %s176
      %s178 = smul.u32 8, %s18
      %p179 = scmp.lt.s32.totalorder %s17, 0
      %s180 = scalar_select %p179, %s17, 0
      %s181 = scalar_lea.vmem %s1, %s180
      %p182 = scmp.lt.s32.totalorder %s18, 3
      %s183 = scalar_select %p182, %s18, 3
      %p184 = scmp.lt.s32.totalorder %s17, 0
      %s185 = scalar_select %p184, %s17, 0
      %s186 = sadd.s32 %s185, %s183
      %s187 = smul.addr %s186, 8
      %s188 = scalar_lea.vmem %s2, %s187
      %v189 = vld [vmem:[%s177] sm:$0xf]
      %v190 = vld [vmem:[%s177 + $0x4] sm:$0xf]
      %v191 = vld [vmem:[%s177 + $0x8] sm:$0xf]
      %v192 = vld [vmem:[%s177 + $0xc] sm:$0xf]
      %v193 = vld [vmem:[%s177 + $0x10] sm:$0xf]
      %v194 = vld [vmem:[%s177 + $0x14] sm:$0xf]
      %v195 = vld [vmem:[%s177 + $0x18] sm:$0xf]
      %v196 = vld [vmem:[%s177 + $0x1c] sm:$0xf]
      %vm197 = vcmask 60416
      %v198 = vsel %vm197, %v189, -inf
      %199 = vmax.xlane.f32.xlu0 %v198
      %v200 = vpop.xlane.xlu0 %199
      %v201 = vsel %vm197, %v190, -inf
      %202 = vmax.xlane.f32.xlu0 %v201
      %v203 = vpop.xlane.xlu0 %202
      %v204 = vsel %vm197, %v191, -inf
      %205 = vmax.xlane.f32.xlu0 %v204
      %v206 = vpop.xlane.xlu0 %205
      %v207 = vsel %vm197, %v192, -inf
      %208 = vmax.xlane.f32.xlu0 %v207
      %v209 = vpop.xlane.xlu0 %208
      %v210 = vsel %vm197, %v193, -inf
      %211 = vmax.xlane.f32.xlu0 %v210
      %v212 = vpop.xlane.xlu0 %211
      %v213 = vsel %vm197, %v194, -inf
      %214 = vmax.xlane.f32.xlu0 %v213
      %v215 = vpop.xlane.xlu0 %214
      %v216 = vsel %vm197, %v195, -inf
      %217 = vmax.xlane.f32.xlu0 %v216
      %v218 = vpop.xlane.xlu0 %217
      %v219 = vsel %vm197, %v196, -inf
      %220 = vmax.xlane.f32.xlu0 %v219
      %v221 = vpop.xlane.xlu0 %220
      %v222 = vlaneseq
      %v223 = vand.u32 %v222, 127
      %vm224 = vcmp.eq.f32.partialorder %v189, %v200
      %vm225 = vcmp.eq.f32.partialorder %v190, %v203
      %vm226 = vcmp.eq.f32.partialorder %v191, %v206
      %vm227 = vcmp.eq.f32.partialorder %v192, %v209
      %vm228 = vcmp.eq.f32.partialorder %v193, %v212
      %vm229 = vcmp.eq.f32.partialorder %v194, %v215
      %vm230 = vcmp.eq.f32.partialorder %v195, %v218
      %vm231 = vcmp.eq.f32.partialorder %v196, %v221
      %v232 = vsel %vm224, %v223, 8
      %v233 = vsel %vm225, %v223, 8
      %v234 = vsel %vm226, %v223, 8
      %v235 = vsel %vm227, %v223, 8
      %v236 = vsel %vm228, %v223, 8
      %v237 = vsel %vm229, %v223, 8
      %v238 = vsel %vm230, %v223, 8
      %v239 = vsel %vm231, %v223, 8
      %v240 = vsel %vm197, %v232, 2147483647
      %v241 = vand.u32 %v240, 65535
      %v242 = vshra.s32 %v240, 16
      %v243 = vcvt.s32.f32 %v241
      %v244 = vcvt.s32.f32 %v242
      %245 = vmin.xlane.f32.xlu0 %v244
      %v246 = vpop.xlane.xlu0 %245
      %vm247 = vcmp.eq.f32.partialorder %v244, %v246
      %v248 = vsel %vm247, %v243, inf
      %249 = vmin.xlane.f32.xlu0 %v248
      %v250 = vpop.xlane.xlu0 %249
      %v251 = vcvt.f32.s32 %v250
      %v252 = vcvt.f32.s32 %v246
      %v253 = vshll.u32 %v252, 16
      %v254 = vadd.s32 %v253, %v251
      %v255 = vsel %vm197, %v233, 2147483647
      %v256 = vand.u32 %v255, 65535
      %v257 = vshra.s32 %v255, 16
      %v258 = vcvt.s32.f32 %v256
      %v259 = vcvt.s32.f32 %v257
      %260 = vmin.xlane.f32.xlu0 %v259
      %v261 = vpop.xlane.xlu0 %260
      %vm262 = vcmp.eq.f32.partialorder %v259, %v261
      %v263 = vsel %vm262, %v258, inf
      %264 = vmin.xlane.f32.xlu0 %v263
      %v265 = vpop.xlane.xlu0 %264
      %v266 = vcvt.f32.s32 %v265
      %v267 = vcvt.f32.s32 %v261
      %v268 = vshll.u32 %v267, 16
      %v269 = vadd.s32 %v268, %v266
      %v270 = vsel %vm197, %v234, 2147483647
      %v271 = vand.u32 %v270, 65535
      %v272 = vshra.s32 %v270, 16
      %v273 = vcvt.s32.f32 %v271
      %v274 = vcvt.s32.f32 %v272
      %275 = vmin.xlane.f32.xlu0 %v274
      %v276 = vpop.xlane.xlu0 %275
      %vm277 = vcmp.eq.f32.partialorder %v274, %v276
      %v278 = vsel %vm277, %v273, inf
      %279 = vmin.xlane.f32.xlu0 %v278
      %v280 = vpop.xlane.xlu0 %279
      %v281 = vcvt.f32.s32 %v280
      %v282 = vcvt.f32.s32 %v276
      %v283 = vshll.u32 %v282, 16
      %v284 = vadd.s32 %v283, %v281
      %v285 = vsel %vm197, %v235, 2147483647
      %v286 = vand.u32 %v285, 65535
      %v287 = vshra.s32 %v285, 16
      %v288 = vcvt.s32.f32 %v286
      %v289 = vcvt.s32.f32 %v287
      %290 = vmin.xlane.f32.xlu0 %v289
      %v291 = vpop.xlane.xlu0 %290
      %vm292 = vcmp.eq.f32.partialorder %v289, %v291
      %v293 = vsel %vm292, %v288, inf
      %294 = vmin.xlane.f32.xlu0 %v293
      %v295 = vpop.xlane.xlu0 %294
      %v296 = vcvt.f32.s32 %v295
      %v297 = vcvt.f32.s32 %v291
      %v298 = vshll.u32 %v297, 16
      %v299 = vadd.s32 %v298, %v296
      %v300 = vsel %vm197, %v236, 2147483647
      %v301 = vand.u32 %v300, 65535
      %v302 = vshra.s32 %v300, 16
      %v303 = vcvt.s32.f32 %v301
      %v304 = vcvt.s32.f32 %v302
      %305 = vmin.xlane.f32.xlu0 %v304
      %v306 = vpop.xlane.xlu0 %305
      %vm307 = vcmp.eq.f32.partialorder %v304, %v306
      %v308 = vsel %vm307, %v303, inf
      %309 = vmin.xlane.f32.xlu0 %v308
      %v310 = vpop.xlane.xlu0 %309
      %v311 = vcvt.f32.s32 %v310
      %v312 = vcvt.f32.s32 %v306
      %v313 = vshll.u32 %v312, 16
      %v314 = vadd.s32 %v313, %v311
      %v315 = vsel %vm197, %v237, 2147483647
      %v316 = vand.u32 %v315, 65535
      %v317 = vshra.s32 %v315, 16
      %v318 = vcvt.s32.f32 %v316
      %v319 = vcvt.s32.f32 %v317
      %320 = vmin.xlane.f32.xlu0 %v319
      %v321 = vpop.xlane.xlu0 %320
      %vm322 = vcmp.eq.f32.partialorder %v319, %v321
      %v323 = vsel %vm322, %v318, inf
      %324 = vmin.xlane.f32.xlu0 %v323
      %v325 = vpop.xlane.xlu0 %324
      %v326 = vcvt.f32.s32 %v325
      %v327 = vcvt.f32.s32 %v321
      %v328 = vshll.u32 %v327, 16
      %v329 = vadd.s32 %v328, %v326
      %v330 = vsel %vm197, %v238, 2147483647
      %v331 = vand.u32 %v330, 65535
      %v332 = vshra.s32 %v330, 16
      %v333 = vcvt.s32.f32 %v331
      %v334 = vcvt.s32.f32 %v332
      %335 = vmin.xlane.f32.xlu0 %v334
      %v336 = vpop.xlane.xlu0 %335
      %vm337 = vcmp.eq.f32.partialorder %v334, %v336
      %v338 = vsel %vm337, %v333, inf
      %339 = vmin.xlane.f32.xlu0 %v338
      %v340 = vpop.xlane.xlu0 %339
      %v341 = vcvt.f32.s32 %v340
      %v342 = vcvt.f32.s32 %v336
      %v343 = vshll.u32 %v342, 16
      %v344 = vadd.s32 %v343, %v341
      %v345 = vsel %vm197, %v239, 2147483647
      %v346 = vand.u32 %v345, 65535
      %v347 = vshra.s32 %v345, 16
      %v348 = vcvt.s32.f32 %v346
      %v349 = vcvt.s32.f32 %v347
      %350 = vmin.xlane.f32.xlu0 %v349
      %v351 = vpop.xlane.xlu0 %350
      %vm352 = vcmp.eq.f32.partialorder %v349, %v351
      %v353 = vsel %vm352, %v348, inf
      %354 = vmin.xlane.f32.xlu0 %v353
      %v355 = vpop.xlane.xlu0 %354
      %v356 = vcvt.f32.s32 %v355
      %v357 = vcvt.f32.s32 %v351
      %v358 = vshll.u32 %v357, 16
      %v359 = vadd.s32 %v358, %v356
      %v360 = vlaneseq
      %v361 = vshrl.u32 %v360, 7
      %s362 = smul.u32 %s18, 8
      %v363 = vstv %s362
      %v364 = vadd.s32 %v361, %v363
      %v365 = vlaneseq
      %v366 = vshrl.u32 %v365, 7
      %v367 = vsub.s32 %v223, %v366
      %v368 = vrot.slane %v359, %v367
      %v369 = vlaneseq
      %v370 = vshrl.u32 %v369, 7
      %v371 = vsub.s32 %v223, %v370
      %v372 = vrot.slane %v254, %v371
      %v373 = vlaneseq
      %v374 = vshrl.u32 %v373, 7
      %v375 = vsub.s32 %v223, %v374
      %v376 = vrot.slane %v269, %v375
      %v377 = vlaneseq
      %v378 = vshrl.u32 %v377, 7
      %v379 = vsub.s32 %v223, %v378
      %v380 = vrot.slane %v284, %v379
      %v381 = vlaneseq
      %v382 = vshrl.u32 %v381, 7
      %v383 = vsub.s32 %v223, %v382
      %v384 = vrot.slane %v299, %v383
      %v385 = vlaneseq
      %v386 = vshrl.u32 %v385, 7
      %v387 = vsub.s32 %v223, %v386
      %v388 = vrot.slane %v314, %v387
      %v389 = vlaneseq
      %v390 = vshrl.u32 %v389, 7
      %v391 = vsub.s32 %v223, %v390
      %v392 = vrot.slane %v329, %v391
      %v393 = vlaneseq
      %v394 = vshrl.u32 %v393, 7
      %v395 = vsub.s32 %v223, %v394
      %v396 = vrot.slane %v344, %v395
      %vm397 = vcmask 1042434
      %v398 = vsel %vm397, %v376, %v372
      %vm399 = vcmask 1043459
      %v400 = vsel %vm399, %v380, %v398
      %vm401 = vcmask 1044484
      %v402 = vsel %vm401, %v384, %v400
      %vm403 = vcmask 1045509
      %v404 = vsel %vm403, %v388, %v402
      %vm405 = vcmask 1046534
      %v406 = vsel %vm405, %v392, %v404
      %vm407 = vcmask 1047559
      %v408 = vsel %vm407, %v396, %v406
      %vm409 = vcmask 1040384
      %v410 = vsel %vm409, %v368, %v408
      %vm411 = vcmp.eq.s32.totalorder %v361, 0
      %v412 = vld [vmem:[#allocation2] sm:$0x1]
      %v413 = vlaneseq
      %v414 = vshrl.u32 %v413, 7
      %v415 = vsub.s32 0, %v414
      %v416 = vrot.slane %v412, %v415
      %v417 = vsel %vm411, %v416, %v410
      %v418 = vld [vmem:[%s181] sm:$0x1]
      %v419 = vlaneseq
      %v420 = vshrl.u32 %v419, 7
      %v421 = vsub.s32 0, %v420
      %v422 = vrot.slane %v418, %v421
      %vm423 = vcmp.lt.s32.totalorder %v364, %v422
      %vm424 = vcmp.ne.s32.totalorder %v254, 0
      %vm425 = vcmp.ne.s32.totalorder %v269, 0
      %vm426 = vcmp.ne.s32.totalorder %v284, 0
      %vm427 = vcmp.ne.s32.totalorder %v299, 0
      %vm428 = vcmp.ne.s32.totalorder %v314, 0
      %vm429 = vcmp.ne.s32.totalorder %v329, 0
      %vm430 = vcmp.ne.s32.totalorder %v344, 0
      %vm431 = vcmp.ne.s32.totalorder %v359, 0
      %v432 = vsel %vm424, 1, 0
      %v433 = vsel %vm425, 1, 0
      %v434 = vsel %vm426, 1, 0
      %v435 = vsel %vm427, 1, 0
      %v436 = vsel %vm428, 1, 0
      %v437 = vsel %vm429, 1, 0
      %v438 = vsel %vm430, 1, 0
      %v439 = vsel %vm431, 1, 0
      %v440 = vlaneseq
      %v441 = vshrl.u32 %v440, 7
      %v442 = vsub.s32 %v223, %v441
      %v443 = vrot.slane %v432, %v442
      %v444 = vlaneseq
      %v445 = vshrl.u32 %v444, 7
      %v446 = vsub.s32 %v223, %v445
      %v447 = vrot.slane %v433, %v446
      %v448 = vlaneseq
      %v449 = vshrl.u32 %v448, 7
      %v450 = vsub.s32 %v223, %v449
      %v451 = vrot.slane %v434, %v450
      %v452 = vlaneseq
      %v453 = vshrl.u32 %v452, 7
      %v454 = vsub.s32 %v223, %v453
      %v455 = vrot.slane %v435, %v454
      %v456 = vlaneseq
      %v457 = vshrl.u32 %v456, 7
      %v458 = vsub.s32 %v223, %v457
      %v459 = vrot.slane %v436, %v458
      %v460 = vlaneseq
      %v461 = vshrl.u32 %v460, 7
      %v462 = vsub.s32 %v223, %v461
      %v463 = vrot.slane %v437, %v462
      %v464 = vlaneseq
      %v465 = vshrl.u32 %v464, 7
      %v466 = vsub.s32 %v223, %v465
      %v467 = vrot.slane %v438, %v466
      %v468 = vlaneseq
      %v469 = vshrl.u32 %v468, 7
      %v470 = vsub.s32 %v223, %v469
      %v471 = vrot.slane %v439, %v470
      %vm472 = vcmask 1041409
      %v473 = vsel %vm472, %v447, %v443
      %v474 = vsel %vm397, %v451, %v473
      %v475 = vsel %vm399, %v455, %v474
      %v476 = vsel %vm401, %v459, %v475
      %v477 = vsel %vm403, %v463, %v476
      %v478 = vsel %vm405, %v467, %v477
      %v479 = vsel %vm407, %v471, %v478
      %vm480 = vcmp.ne.s32.totalorder %v479, 0
      %vm481 = vmand %vm423, %vm480
      %vm482 = vcmp.eq.s32.totalorder %v364, 0
      %vm483 = vcmp.eq.s32.totalorder %v417, 0
      %vm484 = vmor %vm482, %vm483
      %v485 = vlaneseq
      %v486 = vshrl.u32 %v485, 7
      %v487 = vsub.s32 0, %v486
      %v488 = vrot.slane %v417, %v487
      %490 = vbcast.lane.b32.xlu0 %v488, 256
      %v491 = vpop.permute.xlu0 %490
      %v492 = vlaneseq
      %v493 = vshrl.u32 %v492, 7
      %v494 = vsub.s32 1, %v493
      %v495 = vrot.slane %v417, %v494
      %497 = vbcast.lane.b32.xlu0 %v495, 256
      %v498 = vpop.permute.xlu0 %497
      %v499 = vlaneseq
      %v500 = vshrl.u32 %v499, 7
      %v501 = vsub.s32 2, %v500
      %v502 = vrot.slane %v417, %v501
      %504 = vbcast.lane.b32.xlu0 %v502, 256
      %v505 = vpop.permute.xlu0 %504
      %v506 = vlaneseq
      %v507 = vshrl.u32 %v506, 7
      %v508 = vsub.s32 3, %v507
      %v509 = vrot.slane %v417, %v508
      %511 = vbcast.lane.b32.xlu0 %v509, 256
      %v512 = vpop.permute.xlu0 %511
      %v513 = vlaneseq
      %v514 = vshrl.u32 %v513, 7
      %v515 = vsub.s32 4, %v514
      %v516 = vrot.slane %v417, %v515
      %518 = vbcast.lane.b32.xlu0 %v516, 256
      %v519 = vpop.permute.xlu0 %518
      %v520 = vlaneseq
      %v521 = vshrl.u32 %v520, 7
      %v522 = vsub.s32 5, %v521
      %v523 = vrot.slane %v417, %v522
      %525 = vbcast.lane.b32.xlu0 %v523, 256
      %v526 = vpop.permute.xlu0 %525
      %v527 = vlaneseq
      %v528 = vshrl.u32 %v527, 7
      %v529 = vsub.s32 6, %v528
      %v530 = vrot.slane %v417, %v529
      %532 = vbcast.lane.b32.xlu0 %v530, 256
      %v533 = vpop.permute.xlu0 %532
      %v534 = vlaneseq
      %v535 = vshrl.u32 %v534, 7
      %v536 = vsub.s32 7, %v535
      %v537 = vrot.slane %v417, %v536
      %539 = vbcast.lane.b32.xlu0 %v537, 256
      %v540 = vpop.permute.xlu0 %539
      %vm541 = vcmp.ne.s32.totalorder %v254, %v491
      %vm542 = vcmp.ne.s32.totalorder %v269, %v498
      %vm543 = vcmp.ne.s32.totalorder %v284, %v505
      %vm544 = vcmp.ne.s32.totalorder %v299, %v512
      %vm545 = vcmp.ne.s32.totalorder %v314, %v519
      %vm546 = vcmp.ne.s32.totalorder %v329, %v526
      %vm547 = vcmp.ne.s32.totalorder %v344, %v533
      %vm548 = vcmp.ne.s32.totalorder %v359, %v540
      %v549 = vsel %vm541, 1, 0
      %v550 = vsel %vm542, 1, 0
      %v551 = vsel %vm543, 1, 0
      %v552 = vsel %vm544, 1, 0
      %v553 = vsel %vm545, 1, 0
      %v554 = vsel %vm546, 1, 0
      %v555 = vsel %vm547, 1, 0
      %v556 = vsel %vm548, 1, 0
      %557 = vset.pattern.permute.xlu0 0
      %558 = vperm.xlu0 %557, %v549
      %v559 = vpop.permute.xlu0 %558
      %560 = vset.pattern.permute.xlu0 0
      %561 = vperm.xlu0 %560, %v550
      %v562 = vpop.permute.xlu0 %561
      %563 = vset.pattern.permute.xlu0 0
      %564 = vperm.xlu0 %563, %v551
      %v565 = vpop.permute.xlu0 %564
      %566 = vset.pattern.permute.xlu0 0
      %567 = vperm.xlu0 %566, %v552
      %v568 = vpop.permute.xlu0 %567
      %569 = vset.pattern.permute.xlu0 0
      %570 = vperm.xlu0 %569, %v553
      %v571 = vpop.permute.xlu0 %570
      %572 = vset.pattern.permute.xlu0 0
      %573 = vperm.xlu0 %572, %v554
      %v574 = vpop.permute.xlu0 %573
      %575 = vset.pattern.permute.xlu0 0
      %576 = vperm.xlu0 %575, %v555
      %v577 = vpop.permute.xlu0 %576
      %578 = vset.pattern.permute.xlu0 0
      %579 = vperm.xlu0 %578, %v556
      %v580 = vpop.permute.xlu0 %579
      %v581 = vlaneseq
      %v582 = vshrl.u32 %v581, 7
      %v583 = vsub.s32 %v223, %v582
      %v584 = vrot.slane %v559, %v583
      %v585 = vlaneseq
      %v586 = vshrl.u32 %v585, 7
      %v587 = vsub.s32 %v223, %v586
      %v588 = vrot.slane %v562, %v587
      %v589 = vlaneseq
      %v590 = vshrl.u32 %v589, 7
      %v591 = vsub.s32 %v223, %v590
      %v592 = vrot.slane %v565, %v591
      %v593 = vlaneseq
      %v594 = vshrl.u32 %v593, 7
      %v595 = vsub.s32 %v223, %v594
      %v596 = vrot.slane %v568, %v595
      %v597 = vlaneseq
      %v598 = vshrl.u32 %v597, 7
      %v599 = vsub.s32 %v223, %v598
      %v600 = vrot.slane %v571, %v599
      %v601 = vlaneseq
      %v602 = vshrl.u32 %v601, 7
      %v603 = vsub.s32 %v223, %v602
      %v604 = vrot.slane %v574, %v603
      %v605 = vlaneseq
      %v606 = vshrl.u32 %v605, 7
      %v607 = vsub.s32 %v223, %v606
      %v608 = vrot.slane %v577, %v607
      %v609 = vlaneseq
      %v610 = vshrl.u32 %v609, 7
      %v611 = vsub.s32 %v223, %v610
      %v612 = vrot.slane %v580, %v611
      %v613 = vsel %vm472, %v588, %v584
      %v614 = vsel %vm397, %v592, %v613
      %v615 = vsel %vm399, %v596, %v614
      %v616 = vsel %vm401, %v600, %v615
      %v617 = vsel %vm403, %v604, %v616
      %v618 = vsel %vm405, %v608, %v617
      %v619 = vsel %vm407, %v612, %v618
      %vm620 = vcmp.ne.s32.totalorder %v619, 0
      %vm621 = vmor %vm484, %vm620
      %vm622 = vmand %vm481, %vm621
      %v623 = vsel %vm472, %v376, %v372
      %v624 = vsel %vm397, %v380, %v623
      %v625 = vsel %vm399, %v384, %v624
      %v626 = vsel %vm401, %v388, %v625
      %v627 = vsel %vm403, %v392, %v626
      %v628 = vsel %vm405, %v396, %v627
      %v629 = vsel %vm407, %v368, %v628
      %v630 = vsel %vm622, %v629, 4294967295
      %vm631 = vcmask 31744
      %632 = vst.msk [vmem:[%s188] sm:$0xff] %vm631, %v630
      %vm633 = vcmask 24576
      %634 = vst.msk [vmem:[#allocation2] sm:$0x1] %vm633, %v368
      %p635 = scmp.lt.s32.totalorder %s18, 3
      %s636 = scalar_select %p635, %s18, 3
      %p637 = scmp.lt.s32.totalorder %s17, 0
      %s638 = scalar_select %p637, %s17, 0
      %s639 = sadd.s32 %s638, %s636
      %s640 = smul.addr %s639, 8
      %s641 = scalar_lea.vmem %s2, %s640
      // Predicated region
      $region29: #{_run_kernel.1} parent=27 // pred_check
        %p642 = pneg %p99
      $region30: #{_run_kernel.1} parent=27 // pred_check_branch
        %644 = sbr.rel (%p642) target = $region32
      $region31: #{_run_kernel.1} parent=27 // pred_region
        _
      $region32: #{_run_kernel.1} parent=27 // pred_fallthru
        _
    $region28: #{_run_kernel.1} parent=5 // pred_fallthru
      _
    %p645 = scmp.le.s32.totalorder 2, %s8
    // Predicated region
    $region33: #{_run_kernel.1} parent=5 // pred_check
      %p646 = pneg %p645
    $region34: #{_run_kernel.1} parent=5 // pred_check_branch
      %648 = sbr.rel (%p646) target = $region36
    $region35: #{_run_kernel.1} parent=5 // pred_region
      %s649 = ssub.s32 %s8, 2
      // Predicated region
      $region37: #{_run_kernel.1} parent=35 // pred_check
        %p650 = pneg %p105
      $region38: #{_run_kernel.1} parent=35 // pred_check_branch
        %652 = sbr.rel (%p650) target = $region40
      $region39: #{_run_kernel.1} parent=35 // pred_region
        %p653 = scmp.lt.s32.totalorder %s20, 3
        %s654 = scalar_select %p653, %s20, 3
        %p655 = scmp.lt.s32.totalorder %s19, 0
        %s656 = scalar_select %p655, %s19, 0
        %s657 = sadd.s32 %s656, %s654
        %s658 = smul.addr %s657, 8
        %s659 = scalar_lea.vmem %s2, %s658
      $region40: #{_run_kernel.1} parent=35 // pred_fallthru
        _
    $region36: #{_run_kernel.1} parent=5 // pred_fallthru
      _
  $region6: #{_run_kernel.1} parent=0 // loop_footer
    %s12 = sadd.s32 1, %s8
  $region7: #{_run_kernel.1} parent=0 // loop_footer_branch
    %7 = sbr.rel target = $region3
  $region8: #{_run_kernel.1} parent=0 // loop_exit
    _

</llo_original>
